<compile_context>
chip_gen: v7x
topology: tpu7x:2x2x1
jax: 0.10.0
libtpu: 0.0.40
codegen_flags: <defaults>
</compile_context>

<pallas_src>
import math

import jax
import jax.numpy as jnp
from jax.experimental import pallas as pl
from jax.experimental.pallas import tpu as pltpu

# ---- fixed cfg constants -------------------------------------------------
NORM_MEAN = 0.5
NORM_SD = 0.25


def _round_up(v: int, m: int) -> int:
    return ((v + m - 1) // m) * m


def _vmem_limit_bytes() -> int:
    """Generation-aware scoped-VMEM limit: ~96 MiB on 128-MiB parts (v5e/v6e),
    ~48 MiB on 64-MiB v7x."""
    cap = 64 * 1024 * 1024
    try:
        cap = int(getattr(pltpu.get_tpu_info(), "vmem_capacity_bytes", cap))
    except Exception:
        pass
    return min((3 * cap) // 4, 96 * 1024 * 1024)


# ---------------------------------------------------------------------------
# Parameter / input preparation (normalization folding, weight padding).
# x stays f32; only its K axis is padded to a 128-multiple (often a no-op).
# ---------------------------------------------------------------------------
def _prepare(x, params):
    B, N = x.shape[:2]
    K = math.prod(x.shape[2:])
    D = params["w_feat"].shape[1]
    NC = params["wc"].shape[1]

    Dp = _round_up(D, 128)      # lane-dense feature dim
    Cp = _round_up(NC, 128)     # lane-dense logits dim
    Kp = _round_up(K, 128)      # pad K to a 128-multiple only (no TK-sized padding)
    Np = _round_up(N, 128)      # lane-dense attention slab

    # Fold the 'mean_sd' normalization into the feature projection:
    #   ((x - m)/s) @ W + b  ==  x @ (W/s) + (b - (m/s) * sum_k W[k, :])
    w_fold = params["w_feat"] / NORM_SD
    b_fold = params["b_feat"] - (NORM_MEAN / NORM_SD) * jnp.sum(
        params["w_feat"], axis=0, keepdims=True
    )

    wf = jnp.pad(w_fold, ((0, Kp - K), (0, Dp - D))).astype(jnp.bfloat16)
    bf = jnp.pad(b_fold, ((0, 0), (0, Dp - D))).astype(jnp.float32)
    wa_row = jnp.pad(params["wa"].reshape(1, D), ((0, 0), (0, Dp - D))).astype(
        jnp.float32
    )
    wc_p = jnp.pad(params["wc"], ((0, Dp - D), (0, Cp - NC))).astype(jnp.float32)
    bc_p = jnp.pad(params["bc"], ((0, 0), (0, Cp - NC))).astype(jnp.float32)

    # (B,N,C,H,W) -> (B*N, K) is a free row-major reshape; keep f32 (cast in-kernel).
    xp = x.reshape(B * N, K).astype(jnp.float32)
    if Kp != K:
        xp = jnp.pad(xp, ((0, 0), (0, Kp - K)))

    dims = dict(B=B, N=N, K=K, Kp=Kp, D=D, Dp=Dp, NC=NC, Cp=Cp, Np=Np)
    return xp, wf, bf, wa_row, wc_p, bc_p, dims


def _select_tiles(dims, vmem_budget):
    """Pick (TK, bags_per_tile).  TK divides Kp exactly; an M tile is a whole
    number of bags (softmax/pooling must not straddle tiles) and either spans
    all bags or is a multiple of 8 bags (output-block sublane constraint)."""
    B, N, Kp, Dp, Cp, Np = (dims[k] for k in ("B", "N", "Kp", "Dp", "Cp", "Np"))

    if Kp <= 2048:
        TK = Kp
    else:
        TK = 128
        for cand in (2048, 1792, 1536, 1280, 1024, 768, 512, 384, 256):
            if Kp % cand == 0:
                TK = cand
                break

    # Per-M-tile VMEM: double-buffered f32 x tile + f32 accumulator + resident weights.
    fixed = 2 * TK * Dp * 2 + Dp * Cp * 4 + 4 * Dp * 4 + 2 * Cp * 4
    per_row = 2 * TK * 4 + Dp * 4 + ((Cp + Np) * 4) // max(N, 1)
    max_rows = max(N, (vmem_budget - fixed) // max(per_row, 1))
    bags_fit = max(1, max_rows // N)
    if bags_fit >= B:
        bags_per_tile = B                      # single M tile (block == full dim)
    else:
        cands = [d for d in range(8, bags_fit + 1, 8) if B % d == 0]
        bags_per_tile = max(cands) if cands else B
    return TK, bags_per_tile


# ---------------------------------------------------------------------------
# Fused kernel: feature projection (K-tiled, bf16 MXU, f32 acc) + MIL attention
# (v1) + classifier head + sigmoid.  Features never leave VMEM.
# ---------------------------------------------------------------------------
def _make_kernel(bags: int, n: int, dp: int, n_pad: int):
    def kernel(x_ref, w_ref, bfeat_ref, wa_ref, wc_ref, bc_ref,
               logits_ref, attn_ref, acc_ref):
        k = pl.program_id(1)

        @pl.when(k == 0)
        def _init():
            acc_ref[...] = jnp.zeros_like(acc_ref)

        # f32 HBM tile -> bf16 cast in-kernel (VPU, hidden under the MXU),
        # (TM, TK) bf16 @ (TK, Dp) bf16 with f32 accumulation in VMEM scratch.
        acc_ref[...] += jnp.dot(
            x_ref[...].astype(jnp.bfloat16), w_ref[...],
            preferred_element_type=jnp.float32,
        )

        @pl.when(k == pl.num_programs(1) - 1)
        def _finalize():
            acc_ref[...] += bfeat_ref[...]                        # bias in place
            feats = acc_ref[...].reshape(bags, n, dp)             # (bags, N, Dp)
            # Attention v1: Tanh -> Dropout(identity) -> Linear(D, 1).
            # 1-column mat-vec done on VPU mul + lane reduction, not MXU.
            # The `+ ba` bias cancels under softmax -> dropped (post-softmax exact).
            s = jnp.sum(jnp.tanh(feats) * wa_ref[...], axis=-1)   # (bags, N)
            s = s - jnp.max(s, axis=-1, keepdims=True)
            e = jnp.exp(s)
            a = e * pl.reciprocal(jnp.sum(e, axis=-1, keepdims=True), approx=True)
            # Attention-weighted mean, then classifier + sigmoid, batched over all
            # bags of this M tile (one MXU push, one lane-dense store).
            pooled = jnp.sum(feats * a[:, :, None], axis=1)       # (bags, Dp)
            logits = (
                jnp.dot(pooled, wc_ref[...], preferred_element_type=jnp.float32)
                + bc_ref[...]
            )                                                      # (bags, Cp)
            logits_ref[...] = jax.nn.sigmoid(logits)
            # Lane-dense attention store: pad N -> Npad on the lane axis.
            if n_pad > n:
                a = jnp.concatenate(
                    [a, jnp.zeros((bags, n_pad - n), jnp.float32)], axis=-1
                )
            attn_ref[...] = a

    return kernel


def net_forward(x, params):
    """x: (B, N, C, H, W) f32.  Returns dict with 'logits' and 'attn_scores'."""
    xp, wf, bf, wa_row, wc_p, bc_p, dims = _prepare(x, params)
    B, N = dims["B"], dims["N"]
    Kp, Dp, NC, Cp, Np = dims["Kp"], dims["Dp"], dims["NC"], dims["Cp"], dims["Np"]
    BN = B * N

    vmem_limit = _vmem_limit_bytes()
    TK, bags_per_tile = _select_tiles(dims, int(vmem_limit * 0.8))
    TM = bags_per_tile * N
    m_tiles = B // bags_per_tile
    k_tiles = Kp // TK

    kernel = _make_kernel(bags_per_tile, N, Dp, Np)

    cost = pl.CostEstimate(
        flops=2 * BN * Kp * Dp + 2 * B * Dp * Cp,
        transcendentals=BN * Dp + 2 * BN,
        bytes_accessed=BN * Kp * 4 + Kp * Dp * 2 + Dp * Cp * 4 + B * (Cp + Np) * 4,
    )

    logits_p, attn_p = pl.pallas_call(
        kernel,
        out_shape=(
            jax.ShapeDtypeStruct((B, Cp), jnp.float32),   # lane-dense logits slab
            jax.ShapeDtypeStruct((B, Np), jnp.float32),   # lane-dense attention slab
        ),
        grid=(m_tiles, k_tiles),
        in_specs=[
            pl.BlockSpec((TM, TK), lambda m, k: (m, k)),   # x (f32, cast in-kernel)
            pl.BlockSpec((TK, Dp), lambda m, k: (k, 0)),   # folded w_feat (bf16)
            pl.BlockSpec((1, Dp), lambda m, k: (0, 0)),    # folded b_feat
            pl.BlockSpec((1, Dp), lambda m, k: (0, 0)),    # attention weight row
            pl.BlockSpec((Dp, Cp), lambda m, k: (0, 0)),   # classifier weight
            pl.BlockSpec((1, Cp), lambda m, k: (0, 0)),    # classifier bias
        ],
        out_specs=(
            pl.BlockSpec((bags_per_tile, Cp), lambda m, k: (m, 0)),
            pl.BlockSpec((bags_per_tile, Np), lambda m, k: (m, 0)),
        ),
        scratch_shapes=[pltpu.VMEM((TM, Dp), jnp.float32)],  # resident features
        compiler_params=pltpu.CompilerParams(
            dimension_semantics=("parallel", "arbitrary"),    # K is the reduction axis
            vmem_limit_bytes=vmem_limit,
        ),
        cost_estimate=cost,
    )(xp, wf, bf, wa_row, wc_p, bc_p)

    return {
        "logits": logits_p[:, :NC],
        "attn_scores": attn_p[:, :N, None],   # (B, N, 1), matching the module
    }


# ---------------------------------------------------------------------------
# References for correctness checks
# ---------------------------------------------------------------------------
def net_forward_ref(x, params):
    """Pure f32 reference of the original module semantics (incl. attention bias)."""
    B, N = x.shape[:2]
    xf = x.reshape(B * N, -1)
    xn = (xf - NORM_MEAN) / NORM_SD
    hp = jax.lax.Precision.HIGHEST
    feats = jnp.dot(xn, params["w_feat"], precision=hp) + params["b_feat"]
    feats = feats.reshape(B, N, -1)
    a = jnp.einsum("bnd,do->bno", jnp.tanh(feats), params["wa"], precision=hp)
    a = a + params["ba"][0, 0]                  # cancels in softmax, kept for fidelity
    a = jax.nn.softmax(a, axis=1)
    pooled = (feats * a).sum(axis=1)
    logits = jax.nn.sigmoid(jnp.dot(pooled, params["wc"], precision=hp) + params["bc"])
    return logits, a


def net_forward_matched_ref(x, params):
    """Reference mirroring the kernel numerics (folded norm, bf16 matmul inputs)."""
    xp, wf, bf, wa_row, wc_p, bc_p, dims = _prepare(x, params)
    B, N, Dp, NC = dims["B"], dims["N"], dims["Dp"], dims["NC"]
    feats = jnp.dot(xp.astype(jnp.bfloat16), wf,
                    preferred_element_type=jnp.float32) + bf
    feats3 = feats.reshape(B, N, Dp)
    s = jnp.sum(jnp.tanh(feats3) * wa_row, axis=-1, keepdims=True)
    a = jax.nn.softmax(s, axis=1)
    pooled = (feats3 * a).sum(axis=1)
    logits = jax.nn.sigmoid(
        jnp.dot(pooled, wc_p, preferred_element_type=jnp.float32) + bc_p
    )
    return logits[:, :NC], a


if __name__ == "__main__":
    # Small shapes: B=2 bags, N=8 images/bag, C=4, H=W=16, feature_dim D=32, 4 classes.
    B, N, C, H, W = 2, 8, 4, 16, 16
    D, NUM_CLASSES = 32, 4
    K = C * H * W

    key = jax.random.PRNGKey(0)
    kx, k1, k2, k3, k4, k5, k6 = jax.random.split(key, 7)

    x = jax.random.uniform(kx, (B, N, C, H, W), dtype=jnp.float32)

    params = {
        "w_feat": 0.05 * jax.random.normal(k1, (K, D), dtype=jnp.float32),
        "b_feat": 0.05 * jax.random.normal(k2, (1, D), dtype=jnp.float32),
        "wa": 0.2 * jax.random.normal(k3, (D, 1), dtype=jnp.float32),
        "ba": 0.2 * jax.random.normal(k4, (1, 1), dtype=jnp.float32),
        "wc": 0.2 * jax.random.normal(k5, (D, NUM_CLASSES), dtype=jnp.float32),
        "bc": 0.2 * jax.random.normal(k6, (1, NUM_CLASSES), dtype=jnp.float32),
    }

    out = jax.jit(net_forward)(x, params)
    jax.block_until_ready(out)

    assert out["logits"].shape == (B, NUM_CLASSES)
    assert out["attn_scores"].shape == (B, N, 1)

    # 1) Tight check against a reference that mirrors the kernel's numerics
    #    (folded normalization, bf16 matmul inputs, f32 accumulation).
    m_logits, m_attn = net_forward_matched_ref(x, params)
    assert jnp.allclose(out["logits"], m_logits, atol=1e-3, rtol=1e-3)
    assert jnp.allclose(out["attn_scores"], m_attn, atol=1e-3, rtol=1e-3)

    # 2) Looser check against the exact f32 module semantics (bf16 drift).
    f_logits, f_attn = net_forward_ref(x, params)
    assert jnp.allclose(out["logits"], f_logits, atol=2e-2, rtol=2e-2)
    assert jnp.allclose(out["attn_scores"], f_attn, atol=2e-2, rtol=2e-2)

    print("KERNEL_OK")
</pallas_src>

<mosaic_0001>
module attributes {stable_mosaic.version = 11 : i64} {
  func.func @kernel(%arg0: i32, %arg1: i32, %arg2: memref<16x1024xf32, #tpu.memory_space<vmem>>, %arg3: memref<1024x128xbf16, #tpu.memory_space<vmem>>, %arg4: memref<1x128xf32, #tpu.memory_space<vmem>>, %arg5: memref<1x128xf32, #tpu.memory_space<vmem>>, %arg6: memref<128x128xf32, #tpu.memory_space<vmem>>, %arg7: memref<1x128xf32, #tpu.memory_space<vmem>>, %arg8: memref<2x128xf32, #tpu.memory_space<vmem>>, %arg9: memref<2x128xf32, #tpu.memory_space<vmem>>, %arg10: memref<16x128xf32, #tpu.memory_space<vmem>>) attributes {dimension_semantics = [#tpu.dimension_semantics<parallel>, #tpu.dimension_semantics<arbitrary>], iteration_bounds = array<i64: 1, 1>, scalar_prefetch = 0 : i64, scratch_operands = 1 : i64, tpu.core_type = #tpu.core_type<tc>, window_params = [{transform_indices = @transform_0, window_bounds = array<i64: 16, 1024>}, {transform_indices = @transform_1, window_bounds = array<i64: 1024, 128>}, {pipeline_mode = #tpu.pipeline_mode<synchronous>, transform_indices = @transform_2, window_bounds = array<i64: 1, 128>}, {pipeline_mode = #tpu.pipeline_mode<synchronous>, transform_indices = @transform_3, window_bounds = array<i64: 1, 128>}, {pipeline_mode = #tpu.pipeline_mode<synchronous>, transform_indices = @transform_4, window_bounds = array<i64: 128, 128>}, {pipeline_mode = #tpu.pipeline_mode<synchronous>, transform_indices = @transform_5, window_bounds = array<i64: 1, 128>}, {transform_indices = @transform_6, window_bounds = array<i64: 2, 128>}, {transform_indices = @transform_7, window_bounds = array<i64: 2, 128>}]} {
    %c0_i32 = arith.constant 0 : i32
    %0 = arith.cmpi eq, %arg1, %c0_i32 : i32
    %1 = arith.extui %0 : i1 to i32
    %c0_i32_0 = arith.constant 0 : i32
    %2 = arith.cmpi ne, %1, %c0_i32_0 : i32
    scf.if %2 {
      %cst_10 = arith.constant 0.000000e+00 : f32
      %13 = vector.broadcast %cst_10 : f32 to vector<16x128xf32>
      %c0_11 = arith.constant 0 : index
      %c0_12 = arith.constant 0 : index
      %14 = vector.load %arg10[%c0_11, %c0_12] : memref<16x128xf32, #tpu.memory_space<vmem>>, vector<16x128xf32>
      tpu.vector_store %arg10[%c0_11, %c0_12], %13 {strides = array<i32>} : memref<16x128xf32, #tpu.memory_space<vmem>>, vector<16x128xf32>,
    } else {
    }
    %c0 = arith.constant 0 : index
    %c0_1 = arith.constant 0 : index
    %3 = vector.load %arg10[%c0, %c0_1] : memref<16x128xf32, #tpu.memory_space<vmem>>, vector<16x128xf32>
    %c0_2 = arith.constant 0 : index
    %c0_3 = arith.constant 0 : index
    %4 = vector.load %arg2[%c0_2, %c0_3] : memref<16x1024xf32, #tpu.memory_space<vmem>>, vector<16x1024xf32>
    %5 = arith.truncf %4 : vector<16x1024xf32> to vector<16x1024xbf16>
    %c0_4 = arith.constant 0 : index
    %c0_5 = arith.constant 0 : index
    %6 = vector.load %arg3[%c0_4, %c0_5] : memref<1024x128xbf16, #tpu.memory_space<vmem>>, vector<1024x128xbf16>
    %cst = arith.constant dense<0.000000e+00> : vector<16x128xf32>
    %7 = tpu.matmul %5, %6, %cst {dimension_numbers = #tpu.dot_dimension_numbers<[1], [0], [0], [1], [0, 0, 1, 1], [], []>} : vector<16x1024xbf16>, vector<1024x128xbf16>, vector<16x128xf32> -> vector<16x128xf32>
    %8 = arith.addf %3, %7 : vector<16x128xf32>
    %c0_6 = arith.constant 0 : index
    %c0_7 = arith.constant 0 : index
    %9 = vector.load %arg10[%c0_6, %c0_7] : memref<16x128xf32, #tpu.memory_space<vmem>>, vector<16x128xf32>
    tpu.vector_store %arg10[%c0_6, %c0_7], %8 {strides = array<i32>} : memref<16x128xf32, #tpu.memory_space<vmem>>, vector<16x128xf32>,
    %c0_i32_8 = arith.constant 0 : i32
    %10 = arith.cmpi eq, %arg1, %c0_i32_8 : i32
    %11 = arith.extui %10 : i1 to i32
    %c0_i32_9 = arith.constant 0 : i32
    %12 = arith.cmpi ne, %11, %c0_i32_9 : i32
    scf.if %12 {
      %c0_10 = arith.constant 0 : index
      %c0_11 = arith.constant 0 : index
      %13 = vector.load %arg10[%c0_10, %c0_11] : memref<16x128xf32, #tpu.memory_space<vmem>>, vector<16x128xf32>
      %c0_12 = arith.constant 0 : index
      %c0_13 = arith.constant 0 : index
      %14 = vector.load %arg4[%c0_12, %c0_13] : memref<1x128xf32, #tpu.memory_space<vmem>>, vector<1x128xf32>
      %15 = vector.broadcast %14 : vector<1x128xf32> to vector<16x128xf32>
      %16 = arith.addf %13, %15 : vector<16x128xf32>
      %c0_14 = arith.constant 0 : index
      %c0_15 = arith.constant 0 : index
      %17 = vector.load %arg10[%c0_14, %c0_15] : memref<16x128xf32, #tpu.memory_space<vmem>>, vector<16x128xf32>
      tpu.vector_store %arg10[%c0_14, %c0_15], %16 {strides = array<i32>} : memref<16x128xf32, #tpu.memory_space<vmem>>, vector<16x128xf32>,
      %c0_16 = arith.constant 0 : index
      %c0_17 = arith.constant 0 : index
      %18 = vector.load %arg10[%c0_16, %c0_17] : memref<16x128xf32, #tpu.memory_space<vmem>>, vector<16x128xf32>
      %19 = vector.shape_cast %18 : vector<16x128xf32> to vector<2x8x128xf32>
      %20 = math.tanh %19 : vector<2x8x128xf32>
      %c0_18 = arith.constant 0 : index
      %c0_19 = arith.constant 0 : index
      %21 = vector.load %arg5[%c0_18, %c0_19] : memref<1x128xf32, #tpu.memory_space<vmem>>, vector<1x128xf32>
      %22 = vector.shape_cast %21 : vector<1x128xf32> to vector<1x1x128xf32>
      %23 = vector.broadcast %22 : vector<1x1x128xf32> to vector<2x8x128xf32>
      %24 = arith.mulf %20, %23 : vector<2x8x128xf32>
      %cst_20 = arith.constant dense<0.000000e+00> : vector<2x8xf32>
      %25 = vector.multi_reduction <add>, %24, %cst_20 [2] : vector<2x8x128xf32> to vector<2x8xf32>
      %cst_21 = arith.constant dense<0xFF800000> : vector<2xf32>
      %26 = vector.multi_reduction <maximumf>, %25, %cst_21 [1] : vector<2x8xf32> to vector<2xf32>
      %27 = vector.shape_cast %26 : vector<2xf32> to vector<2x1xf32>
      %28 = vector.broadcast %27 : vector<2x1xf32> to vector<2x8xf32>
      %29 = arith.subf %25, %28 : vector<2x8xf32>
      %30 = math.exp %29 : vector<2x8xf32>
      %cst_22 = arith.constant dense<0.000000e+00> : vector<2xf32>
      %31 = vector.multi_reduction <add>, %30, %cst_22 [1] : vector<2x8xf32> to vector<2xf32>
      %32 = vector.shape_cast %31 : vector<2xf32> to vector<2x1xf32>
      %33 = tpu.reciprocal %32 {approx = true} : vector<2x1xf32> -> vector<2x1xf32>
      %34 = vector.broadcast %33 : vector<2x1xf32> to vector<2x8xf32>
      %35 = arith.mulf %30, %34 : vector<2x8xf32>
      %36 = vector.shape_cast %35 : vector<2x8xf32> to vector<2x8x1xf32>
      %37 = vector.broadcast %36 : vector<2x8x1xf32> to vector<2x8x128xf32>
      %38 = arith.mulf %19, %37 : vector<2x8x128xf32>
      %cst_23 = arith.constant dense<0.000000e+00> : vector<2x128xf32>
      %39 = vector.multi_reduction <add>, %38, %cst_23 [1] : vector<2x8x128xf32> to vector<2x128xf32>
      %c0_24 = arith.constant 0 : index
      %c0_25 = arith.constant 0 : index
      %40 = vector.load %arg6[%c0_24, %c0_25] : memref<128x128xf32, #tpu.memory_space<vmem>>, vector<128x128xf32>
      %cst_26 = arith.constant dense<0.000000e+00> : vector<2x128xf32>
      %41 = tpu.matmul %39, %40, %cst_26 {dimension_numbers = #tpu.dot_dimension_numbers<[1], [0], [0], [1], [0, 0, 1, 1], [], []>} : vector<2x128xf32>, vector<128x128xf32>, vector<2x128xf32> -> vector<2x128xf32>
      %c0_27 = arith.constant 0 : index
      %c0_28 = arith.constant 0 : index
      %42 = vector.load %arg7[%c0_27, %c0_28] : memref<1x128xf32, #tpu.memory_space<vmem>>, vector<1x128xf32>
      %43 = vector.broadcast %42 : vector<1x128xf32> to vector<2x128xf32>
      %44 = arith.addf %41, %43 : vector<2x128xf32>
      %45 = arith.negf %44 : vector<2x128xf32>
      %46 = math.exp %45 : vector<2x128xf32>
      %cst_29 = arith.constant 1.000000e+00 : f32
      %47 = vector.broadcast %cst_29 : f32 to vector<2x128xf32>
      %48 = arith.addf %47, %46 : vector<2x128xf32>
      %49 = arith.divf %47, %48 : vector<2x128xf32>
      %c0_30 = arith.constant 0 : index
      %c0_31 = arith.constant 0 : index
      %50 = vector.load %arg8[%c0_30, %c0_31] : memref<2x128xf32, #tpu.memory_space<vmem>>, vector<2x128xf32>
      tpu.vector_store %arg8[%c0_30, %c0_31], %49 {strides = array<i32>} : memref<2x128xf32, #tpu.memory_space<vmem>>, vector<2x128xf32>,
      %cst_32 = arith.constant 0.000000e+00 : f32
      %51 = vector.broadcast %cst_32 : f32 to vector<2x120xf32>
      %52 = tpu.concatenate %35, %51 in 1 : vector<2x8xf32>, vector<2x120xf32> -> vector<2x128xf32>
      %c0_33 = arith.constant 0 : index
      %c0_34 = arith.constant 0 : index
      %53 = vector.load %arg9[%c0_33, %c0_34] : memref<2x128xf32, #tpu.memory_space<vmem>>, vector<2x128xf32>
      tpu.vector_store %arg9[%c0_33, %c0_34], %52 {strides = array<i32>} : memref<2x128xf32, #tpu.memory_space<vmem>>, vector<2x128xf32>,
    } else {
    }
    return
  }
  func.func @transform_0(%arg0: i32, %arg1: i32) -> (i32, i32) {
    %c0_i32 = arith.constant 0 : i32
    return %arg0, %arg1 : i32, i32
  }
  func.func @transform_1(%arg0: i32, %arg1: i32) -> (i32, i32) {
    %c0_i32 = arith.constant 0 : i32
    %c0_i32_0 = arith.constant 0 : i32
    return %arg1, %c0_i32 : i32, i32
  }
  func.func @transform_2(%arg0: i32, %arg1: i32) -> (i32, i32) {
    %c0_i32 = arith.constant 0 : i32
    %c0_i32_0 = arith.constant 0 : i32
    %c0_i32_1 = arith.constant 0 : i32
    return %c0_i32, %c0_i32_0 : i32, i32
  }
  func.func @transform_3(%arg0: i32, %arg1: i32) -> (i32, i32) {
    %c0_i32 = arith.constant 0 : i32
    %c0_i32_0 = arith.constant 0 : i32
    %c0_i32_1 = arith.constant 0 : i32
    return %c0_i32, %c0_i32_0 : i32, i32
  }
  func.func @transform_4(%arg0: i32, %arg1: i32) -> (i32, i32) {
    %c0_i32 = arith.constant 0 : i32
    %c0_i32_0 = arith.constant 0 : i32
    %c0_i32_1 = arith.constant 0 : i32
    return %c0_i32, %c0_i32_0 : i32, i32
  }
  func.func @transform_5(%arg0: i32, %arg1: i32) -> (i32, i32) {
    %c0_i32 = arith.constant 0 : i32
    %c0_i32_0 = arith.constant 0 : i32
    %c0_i32_1 = arith.constant 0 : i32
    return %c0_i32, %c0_i32_0 : i32, i32
  }
  func.func @transform_6(%arg0: i32, %arg1: i32) -> (i32, i32) {
    %c0_i32 = arith.constant 0 : i32
    %c0_i32_0 = arith.constant 0 : i32
    return %arg0, %c0_i32 : i32, i32
  }
  func.func @transform_7(%arg0: i32, %arg1: i32) -> (i32, i32) {
    %c0_i32 = arith.constant 0 : i32
    %c0_i32_0 = arith.constant 0 : i32
    return %arg0, %c0_i32 : i32, i32
  }
}

</mosaic_0001>

<llo_original>
// kernel: net_forward.1
$region0: #{net_forward.1}
  #allocation0 [shape = 'u32[]', space=smem, size = 0x4, offset = 0x4, fixed_abs, tag = 'smem constant byte address 0x4 - core index']
  #allocation1 [shape = 'u32[144,128]{1,0:T(1,128)}', space=vmem, size = 0x12000, scoped, tag = 'internal scratch']
  #allocation2 [shape = 'f32[16,128]{1,0:T(8,128)}', space=vmem, size = 0x2000, scoped, tag = 'scratch operand']
  %s0 = inlined_call_operand.vmem [shape: f32[16,1024], index: 0, kind: input, shape index: {}]
  %s1 = inlined_call_operand.vmem [shape: bf16[1024,128], index: 1, kind: input, shape index: {}]
  %s2 = inlined_call_operand.vmem [shape: f32[1,128], index: 2, kind: input, shape index: {}]
  %s3 = inlined_call_operand.vmem [shape: f32[1,128], index: 3, kind: input, shape index: {}]
  %s4 = inlined_call_operand.vmem [shape: f32[128,128], index: 4, kind: input, shape index: {}]
  %s5 = inlined_call_operand.vmem [shape: f32[1,128], index: 5, kind: input, shape index: {}]
  %s6 = inlined_call_operand.hbm [shape: f32[2,128], index: 6, kind: output, shape index: {0}]
  %s7 = inlined_call_operand.hbm [shape: f32[2,128], index: 7, kind: output, shape index: {1}]
  %8 = xla_tuple %s6, %s7
  %s9 = sld [smem:[#allocation0]]
  $region50: #{net_forward.1} parent=0
    _
  %s11 = ssub.s32 1, %s9
  %s12 = scalar_select 0, %s11, %s9
  $region1: #{net_forward.1} parent=0
    #allocation3 [shape = 'u8[1024]{0}', space=vmem, size = 0x400, scoped, tag = 'output window, operand 0, single buffered']
    #allocation4 [shape = 's32[1]{0}', space=sflag, size = 0x4, scoped, tag = 'scoped memory for net_forward.1']
    #allocation5 [shape = 'u8[1024]{0}', space=vmem, size = 0x400, scoped, tag = 'output window, operand 1, single buffered']
    #allocation6 [shape = 's32[1]{0}', space=sflag, size = 0x4, scoped, tag = 'scoped memory for net_forward.1']
    %13 = vsyncpa [#allocation4], 0
    %14 = vsyncpa [#allocation6], 0
    // Predicated region
    $region2: #{net_forward.1} parent=1 // pred_check
      _
    $region3: #{net_forward.1} parent=1 // pred_check_branch
      %16 = sbr.rel (0) target = $region5
    $region4: #{net_forward.1} parent=1 // pred_region
      _
    $region5: #{net_forward.1} parent=1 // pred_fallthru
      _
    // Predicated region
    $region6: #{net_forward.1} parent=1 // pred_check
      _
    $region7: #{net_forward.1} parent=1 // pred_check_branch
      %18 = sbr.rel (0) target = $region9
    $region8: #{net_forward.1} parent=1 // pred_region
      _
    $region9: #{net_forward.1} parent=1 // pred_fallthru
      _
    // Predicated region
    $region10: #{net_forward.1} parent=1 // pred_check
      _
    $region11: #{net_forward.1} parent=1 // pred_check_branch
      %20 = sbr.rel (0) target = $region13
    $region12: #{net_forward.1} parent=1 // pred_region
      _
    $region13: #{net_forward.1} parent=1 // pred_fallthru
      _
    // Predicated region
    $region14: #{net_forward.1} parent=1 // pred_check
      _
    $region15: #{net_forward.1} parent=1 // pred_check_branch
      %22 = sbr.rel (0) target = $region17
    $region16: #{net_forward.1} parent=1 // pred_region
      _
    $region17: #{net_forward.1} parent=1 // pred_fallthru
      _
    // Predicated region
    $region18: #{net_forward.1} parent=1 // pred_check
      _
    $region19: #{net_forward.1} parent=1 // pred_check_branch
      %24 = sbr.rel (0) target = $region21
    $region20: #{net_forward.1} parent=1 // pred_region
      _
    $region21: #{net_forward.1} parent=1 // pred_fallthru
      _
    // Predicated region
    $region22: #{net_forward.1} parent=1 // pred_check
      _
    $region23: #{net_forward.1} parent=1 // pred_check_branch
      %26 = sbr.rel (0) target = $region25
    $region24: #{net_forward.1} parent=1 // pred_region
      _
    $region25: #{net_forward.1} parent=1 // pred_fallthru
      _
    %p28 = scmp.eq.s32.totalorder 0, 0
    // Predicated region
    $region26: #{net_forward.1} parent=1 // pred_check
      %p29 = pneg %p28
    $region27: #{net_forward.1} parent=1 // pred_check_branch
      %31 = sbr.rel (%p29) target = $region29
    $region28: #{net_forward.1} parent=1 // pred_region
      %32 = vst [vmem:[#allocation2] sm:$0xff] 0.0
      %33 = vst [vmem:[#allocation2 + $0x8] sm:$0xff] 0.0
    $region29: #{net_forward.1} parent=1 // pred_fallthru
      _
    %v34 = vld [vmem:[#allocation2] sm:$0xff]
    %v35 = vld [vmem:[#allocation2 + $0x8] sm:$0xff]
    %v36 = vld [vmem:[%s0] sm:$0xff]
    %v37 = vld [vmem:[%s0 + $0x8] sm:$0xff]
    %v38 = vld [vmem:[%s0 + $0x10] sm:$0xff]
    %v39 = vld [vmem:[%s0 + $0x18] sm:$0xff]
    %v40 = vld [vmem:[%s0 + $0x20] sm:$0xff]
    %v41 = vld [vmem:[%s0 + $0x28] sm:$0xff]
    %v42 = vld [vmem:[%s0 + $0x30] sm:$0xff]
    %v43 = vld [vmem:[%s0 + $0x38] sm:$0xff]
    %v44 = vld [vmem:[%s0 + $0x40] sm:$0xff]
    %v45 = vld [vmem:[%s0 + $0x48] sm:$0xff]
    %v46 = vld [vmem:[%s0 + $0x50] sm:$0xff]
    %v47 = vld [vmem:[%s0 + $0x58] sm:$0xff]
    %v48 = vld [vmem:[%s0 + $0x60] sm:$0xff]
    %v49 = vld [vmem:[%s0 + $0x68] sm:$0xff]
    %v50 = vld [vmem:[%s0 + $0x70] sm:$0xff]
    %v51 = vld [vmem:[%s0 + $0x78] sm:$0xff]
    %v52 = vpack.c.bf16 %v44, %v36
    %v53 = vpack.c.bf16 %v45, %v37
    %v54 = vpack.c.bf16 %v46, %v38
    %v55 = vpack.c.bf16 %v47, %v39
    %v56 = vpack.c.bf16 %v48, %v40
    %v57 = vpack.c.bf16 %v49, %v41
    %v58 = vpack.c.bf16 %v50, %v42
    %v59 = vpack.c.bf16 %v51, %v43
    %v60 = vld [vmem:[%s1] sm:$0xf]
    %v61 = vld [vmem:[%s1 + $0x4] sm:$0xf]
    %v62 = vld [vmem:[%s1 + $0x8] sm:$0xf]
    %v63 = vld [vmem:[%s1 + $0xc] sm:$0xf]
    %v64 = vld [vmem:[%s1 + $0x10] sm:$0xf]
    %v65 = vld [vmem:[%s1 + $0x14] sm:$0xf]
    %v66 = vld [vmem:[%s1 + $0x18] sm:$0xf]
    %v67 = vld [vmem:[%s1 + $0x1c] sm:$0xf]
    %v68 = vld [vmem:[%s1 + $0x20] sm:$0xf]
    %v69 = vld [vmem:[%s1 + $0x24] sm:$0xf]
    %v70 = vld [vmem:[%s1 + $0x28] sm:$0xf]
    %v71 = vld [vmem:[%s1 + $0x2c] sm:$0xf]
    %v72 = vld [vmem:[%s1 + $0x30] sm:$0xf]
    %v73 = vld [vmem:[%s1 + $0x34] sm:$0xf]
    %v74 = vld [vmem:[%s1 + $0x38] sm:$0xf]
    %v75 = vld [vmem:[%s1 + $0x3c] sm:$0xf]
    %v76 = vld [vmem:[%s1 + $0x40] sm:$0xf]
    %v77 = vld [vmem:[%s1 + $0x44] sm:$0xf]
    %v78 = vld [vmem:[%s1 + $0x48] sm:$0xf]
    %v79 = vld [vmem:[%s1 + $0x4c] sm:$0xf]
    %v80 = vld [vmem:[%s1 + $0x50] sm:$0xf]
    %v81 = vld [vmem:[%s1 + $0x54] sm:$0xf]
    %v82 = vld [vmem:[%s1 + $0x58] sm:$0xf]
    %v83 = vld [vmem:[%s1 + $0x5c] sm:$0xf]
    %v84 = vld [vmem:[%s1 + $0x60] sm:$0xf]
    %v85 = vld [vmem:[%s1 + $0x64] sm:$0xf]
    %v86 = vld [vmem:[%s1 + $0x68] sm:$0xf]
    %v87 = vld [vmem:[%s1 + $0x6c] sm:$0xf]
    %v88 = vld [vmem:[%s1 + $0x70] sm:$0xf]
    %v89 = vld [vmem:[%s1 + $0x74] sm:$0xf]
    %v90 = vld [vmem:[%s1 + $0x78] sm:$0xf]
    %v91 = vld [vmem:[%s1 + $0x7c] sm:$0xf]
    %v92 = vld [vmem:[%s1 + $0x80] sm:$0xf]
    %v93 = vld [vmem:[%s1 + $0x84] sm:$0xf]
    %v94 = vld [vmem:[%s1 + $0x88] sm:$0xf]
    %v95 = vld [vmem:[%s1 + $0x8c] sm:$0xf]
    %v96 = vld [vmem:[%s1 + $0x90] sm:$0xf]
    %v97 = vld [vmem:[%s1 + $0x94] sm:$0xf]
    %v98 = vld [vmem:[%s1 + $0x98] sm:$0xf]
    %v99 = vld [vmem:[%s1 + $0x9c] sm:$0xf]
    %v100 = vld [vmem:[%s1 + $0xa0] sm:$0xf]
    %v101 = vld [vmem:[%s1 + $0xa4] sm:$0xf]
    %v102 = vld [vmem:[%s1 + $0xa8] sm:$0xf]
    %v103 = vld [vmem:[%s1 + $0xac] sm:$0xf]
    %v104 = vld [vmem:[%s1 + $0xb0] sm:$0xf]
    %v105 = vld [vmem:[%s1 + $0xb4] sm:$0xf]
    %v106 = vld [vmem:[%s1 + $0xb8] sm:$0xf]
    %v107 = vld [vmem:[%s1 + $0xbc] sm:$0xf]
    %v108 = vld [vmem:[%s1 + $0xc0] sm:$0xf]
    %v109 = vld [vmem:[%s1 + $0xc4] sm:$0xf]
    %v110 = vld [vmem:[%s1 + $0xc8] sm:$0xf]
    %v111 = vld [vmem:[%s1 + $0xcc] sm:$0xf]
    %v112 = vld [vmem:[%s1 + $0xd0] sm:$0xf]
    %v113 = vld [vmem:[%s1 + $0xd4] sm:$0xf]
    %v114 = vld [vmem:[%s1 + $0xd8] sm:$0xf]
    %v115 = vld [vmem:[%s1 + $0xdc] sm:$0xf]
    %v116 = vld [vmem:[%s1 + $0xe0] sm:$0xf]
    %v117 = vld [vmem:[%s1 + $0xe4] sm:$0xf]
    %v118 = vld [vmem:[%s1 + $0xe8] sm:$0xf]
    %v119 = vld [vmem:[%s1 + $0xec] sm:$0xf]
    %v120 = vld [vmem:[%s1 + $0xf0] sm:$0xf]
    %v121 = vld [vmem:[%s1 + $0xf4] sm:$0xf]
    %v122 = vld [vmem:[%s1 + $0xf8] sm:$0xf]
    %v123 = vld [vmem:[%s1 + $0xfc] sm:$0xf]
    %v124 = vld [vmem:[%s1 + $0x100] sm:$0xf]
    %v125 = vld [vmem:[%s1 + $0x104] sm:$0xf]
    %v126 = vld [vmem:[%s1 + $0x108] sm:$0xf]
    %v127 = vld [vmem:[%s1 + $0x10c] sm:$0xf]
    %v128 = vld [vmem:[%s1 + $0x110] sm:$0xf]
    %v129 = vld [vmem:[%s1 + $0x114] sm:$0xf]
    %v130 = vld [vmem:[%s1 + $0x118] sm:$0xf]
    %v131 = vld [vmem:[%s1 + $0x11c] sm:$0xf]
    %v132 = vld [vmem:[%s1 + $0x120] sm:$0xf]
    %v133 = vld [vmem:[%s1 + $0x124] sm:$0xf]
    %v134 = vld [vmem:[%s1 + $0x128] sm:$0xf]
    %v135 = vld [vmem:[%s1 + $0x12c] sm:$0xf]
    %v136 = vld [vmem:[%s1 + $0x130] sm:$0xf]
    %v137 = vld [vmem:[%s1 + $0x134] sm:$0xf]
    %v138 = vld [vmem:[%s1 + $0x138] sm:$0xf]
    %v139 = vld [vmem:[%s1 + $0x13c] sm:$0xf]
    %v140 = vld [vmem:[%s1 + $0x140] sm:$0xf]
    %v141 = vld [vmem:[%s1 + $0x144] sm:$0xf]
    %v142 = vld [vmem:[%s1 + $0x148] sm:$0xf]
    %v143 = vld [vmem:[%s1 + $0x14c] sm:$0xf]
    %v144 = vld [vmem:[%s1 + $0x150] sm:$0xf]
    %v145 = vld [vmem:[%s1 + $0x154] sm:$0xf]
    %v146 = vld [vmem:[%s1 + $0x158] sm:$0xf]
    %v147 = vld [vmem:[%s1 + $0x15c] sm:$0xf]
    %v148 = vld [vmem:[%s1 + $0x160] sm:$0xf]
    %v149 = vld [vmem:[%s1 + $0x164] sm:$0xf]
    %v150 = vld [vmem:[%s1 + $0x168] sm:$0xf]
    %v151 = vld [vmem:[%s1 + $0x16c] sm:$0xf]
    %v152 = vld [vmem:[%s1 + $0x170] sm:$0xf]
    %v153 = vld [vmem:[%s1 + $0x174] sm:$0xf]
    %v154 = vld [vmem:[%s1 + $0x178] sm:$0xf]
    %v155 = vld [vmem:[%s1 + $0x17c] sm:$0xf]
    %v156 = vld [vmem:[%s1 + $0x180] sm:$0xf]
    %v157 = vld [vmem:[%s1 + $0x184] sm:$0xf]
    %v158 = vld [vmem:[%s1 + $0x188] sm:$0xf]
    %v159 = vld [vmem:[%s1 + $0x18c] sm:$0xf]
    %v160 = vld [vmem:[%s1 + $0x190] sm:$0xf]
    %v161 = vld [vmem:[%s1 + $0x194] sm:$0xf]
    %v162 = vld [vmem:[%s1 + $0x198] sm:$0xf]
    %v163 = vld [vmem:[%s1 + $0x19c] sm:$0xf]
    %v164 = vld [vmem:[%s1 + $0x1a0] sm:$0xf]
    %v165 = vld [vmem:[%s1 + $0x1a4] sm:$0xf]
    %v166 = vld [vmem:[%s1 + $0x1a8] sm:$0xf]
    %v167 = vld [vmem:[%s1 + $0x1ac] sm:$0xf]
    %v168 = vld [vmem:[%s1 + $0x1b0] sm:$0xf]
    %v169 = vld [vmem:[%s1 + $0x1b4] sm:$0xf]
    %v170 = vld [vmem:[%s1 + $0x1b8] sm:$0xf]
    %v171 = vld [vmem:[%s1 + $0x1bc] sm:$0xf]
    %v172 = vld [vmem:[%s1 + $0x1c0] sm:$0xf]
    %v173 = vld [vmem:[%s1 + $0x1c4] sm:$0xf]
    %v174 = vld [vmem:[%s1 + $0x1c8] sm:$0xf]
    %v175 = vld [vmem:[%s1 + $0x1cc] sm:$0xf]
    %v176 = vld [vmem:[%s1 + $0x1d0] sm:$0xf]
    %v177 = vld [vmem:[%s1 + $0x1d4] sm:$0xf]
    %v178 = vld [vmem:[%s1 + $0x1d8] sm:$0xf]
    %v179 = vld [vmem:[%s1 + $0x1dc] sm:$0xf]
    %v180 = vld [vmem:[%s1 + $0x1e0] sm:$0xf]
    %v181 = vld [vmem:[%s1 + $0x1e4] sm:$0xf]
    %v182 = vld [vmem:[%s1 + $0x1e8] sm:$0xf]
    %v183 = vld [vmem:[%s1 + $0x1ec] sm:$0xf]
    %v184 = vld [vmem:[%s1 + $0x1f0] sm:$0xf]
    %v185 = vld [vmem:[%s1 + $0x1f4] sm:$0xf]
    %v186 = vld [vmem:[%s1 + $0x1f8] sm:$0xf]
    %v187 = vld [vmem:[%s1 + $0x1fc] sm:$0xf]
    %v316 = vunpack.c.l.b16 %v60
    %v317 = vunpack.c.l.b16 %v61
    %v318 = vunpack.c.l.b16 %v62
    %v319 = vunpack.c.l.b16 %v63
    %v320 = vunpack.c.l.b16 %v64
    %v321 = vunpack.c.l.b16 %v65
    %v322 = vunpack.c.l.b16 %v66
    %v323 = vunpack.c.l.b16 %v67
    %v324 = vunpack.c.l.b16 %v68
    %v325 = vunpack.c.l.b16 %v69
    %v326 = vunpack.c.l.b16 %v70
    %v327 = vunpack.c.l.b16 %v71
    %v328 = vunpack.c.l.b16 %v72
    %v329 = vunpack.c.l.b16 %v73
    %v330 = vunpack.c.l.b16 %v74
    %v331 = vunpack.c.l.b16 %v75
    %v332 = vunpack.c.l.b16 %v76
    %v333 = vunpack.c.l.b16 %v77
    %v334 = vunpack.c.l.b16 %v78
    %v335 = vunpack.c.l.b16 %v79
    %v336 = vunpack.c.l.b16 %v80
    %v337 = vunpack.c.l.b16 %v81
    %v338 = vunpack.c.l.b16 %v82
    %v339 = vunpack.c.l.b16 %v83
    %v340 = vunpack.c.l.b16 %v84
    %v341 = vunpack.c.l.b16 %v85
    %v342 = vunpack.c.l.b16 %v86
    %v343 = vunpack.c.l.b16 %v87
    %v344 = vunpack.c.l.b16 %v88
    %v345 = vunpack.c.l.b16 %v89
    %v346 = vunpack.c.l.b16 %v90
    %v347 = vunpack.c.l.b16 %v91
    %v348 = vunpack.c.l.b16 %v92
    %v349 = vunpack.c.l.b16 %v93
    %v350 = vunpack.c.l.b16 %v94
    %v351 = vunpack.c.l.b16 %v95
    %v352 = vunpack.c.l.b16 %v96
    %v353 = vunpack.c.l.b16 %v97
    %v354 = vunpack.c.l.b16 %v98
    %v355 = vunpack.c.l.b16 %v99
    %v356 = vunpack.c.l.b16 %v100
    %v357 = vunpack.c.l.b16 %v101
    %v358 = vunpack.c.l.b16 %v102
    %v359 = vunpack.c.l.b16 %v103
    %v360 = vunpack.c.l.b16 %v104
    %v361 = vunpack.c.l.b16 %v105
    %v362 = vunpack.c.l.b16 %v106
    %v363 = vunpack.c.l.b16 %v107
    %v364 = vunpack.c.l.b16 %v108
    %v365 = vunpack.c.l.b16 %v109
    %v366 = vunpack.c.l.b16 %v110
    %v367 = vunpack.c.l.b16 %v111
    %v368 = vunpack.c.l.b16 %v112
    %v369 = vunpack.c.l.b16 %v113
    %v370 = vunpack.c.l.b16 %v114
    %v371 = vunpack.c.l.b16 %v115
    %v372 = vunpack.c.l.b16 %v116
    %v373 = vunpack.c.l.b16 %v117
    %v374 = vunpack.c.l.b16 %v118
    %v375 = vunpack.c.l.b16 %v119
    %v376 = vunpack.c.l.b16 %v120
    %v377 = vunpack.c.l.b16 %v121
    %v378 = vunpack.c.l.b16 %v122
    %v379 = vunpack.c.l.b16 %v123
    %v380 = vunpack.c.l.b16 %v124
    %v381 = vunpack.c.l.b16 %v125
    %v382 = vunpack.c.l.b16 %v126
    %v383 = vunpack.c.l.b16 %v127
    %v384 = vunpack.c.l.b16 %v128
    %v385 = vunpack.c.l.b16 %v129
    %v386 = vunpack.c.l.b16 %v130
    %v387 = vunpack.c.l.b16 %v131
    %v388 = vunpack.c.l.b16 %v132
    %v389 = vunpack.c.l.b16 %v133
    %v390 = vunpack.c.l.b16 %v134
    %v391 = vunpack.c.l.b16 %v135
    %v392 = vunpack.c.l.b16 %v136
    %v393 = vunpack.c.l.b16 %v137
    %v394 = vunpack.c.l.b16 %v138
    %v395 = vunpack.c.l.b16 %v139
    %v396 = vunpack.c.l.b16 %v140
    %v397 = vunpack.c.l.b16 %v141
    %v398 = vunpack.c.l.b16 %v142
    %v399 = vunpack.c.l.b16 %v143
    %v400 = vunpack.c.l.b16 %v144
    %v401 = vunpack.c.l.b16 %v145
    %v402 = vunpack.c.l.b16 %v146
    %v403 = vunpack.c.l.b16 %v147
    %v404 = vunpack.c.l.b16 %v148
    %v405 = vunpack.c.l.b16 %v149
    %v406 = vunpack.c.l.b16 %v150
    %v407 = vunpack.c.l.b16 %v151
    %v408 = vunpack.c.l.b16 %v152
    %v409 = vunpack.c.l.b16 %v153
    %v410 = vunpack.c.l.b16 %v154
    %v411 = vunpack.c.l.b16 %v155
    %v412 = vunpack.c.l.b16 %v156
    %v413 = vunpack.c.l.b16 %v157
    %v414 = vunpack.c.l.b16 %v158
    %v415 = vunpack.c.l.b16 %v159
    %v416 = vunpack.c.l.b16 %v160
    %v417 = vunpack.c.l.b16 %v161
    %v418 = vunpack.c.l.b16 %v162
    %v419 = vunpack.c.l.b16 %v163
    %v420 = vunpack.c.l.b16 %v164
    %v421 = vunpack.c.l.b16 %v165
    %v422 = vunpack.c.l.b16 %v166
    %v423 = vunpack.c.l.b16 %v167
    %v424 = vunpack.c.l.b16 %v168
    %v425 = vunpack.c.l.b16 %v169
    %v426 = vunpack.c.l.b16 %v170
    %v427 = vunpack.c.l.b16 %v171
    %v428 = vunpack.c.l.b16 %v172
    %v429 = vunpack.c.l.b16 %v173
    %v430 = vunpack.c.l.b16 %v174
    %v431 = vunpack.c.l.b16 %v175
    %v432 = vunpack.c.l.b16 %v176
    %v433 = vunpack.c.l.b16 %v177
    %v434 = vunpack.c.l.b16 %v178
    %v435 = vunpack.c.l.b16 %v179
    %v436 = vunpack.c.l.b16 %v180
    %v437 = vunpack.c.l.b16 %v181
    %v438 = vunpack.c.l.b16 %v182
    %v439 = vunpack.c.l.b16 %v183
    %v440 = vunpack.c.l.b16 %v184
    %v441 = vunpack.c.l.b16 %v185
    %v442 = vunpack.c.l.b16 %v186
    %v443 = vunpack.c.l.b16 %v187
    %v444 = vpack.c.b16 %v317, %v316
    %v445 = vpack.c.b16 %v319, %v318
    %v446 = vpack.c.b16 %v321, %v320
    %v447 = vpack.c.b16 %v323, %v322
    %v448 = vpack.c.b16 %v325, %v324
    %v449 = vpack.c.b16 %v327, %v326
    %v450 = vpack.c.b16 %v329, %v328
    %v451 = vpack.c.b16 %v331, %v330
    %v452 = vpack.c.b16 %v333, %v332
    %v453 = vpack.c.b16 %v335, %v334
    %v454 = vpack.c.b16 %v337, %v336
    %v455 = vpack.c.b16 %v339, %v338
    %v456 = vpack.c.b16 %v341, %v340
    %v457 = vpack.c.b16 %v343, %v342
    %v458 = vpack.c.b16 %v345, %v344
    %v459 = vpack.c.b16 %v347, %v346
    %v460 = vpack.c.b16 %v349, %v348
    %v461 = vpack.c.b16 %v351, %v350
    %v462 = vpack.c.b16 %v353, %v352
    %v463 = vpack.c.b16 %v355, %v354
    %v464 = vpack.c.b16 %v357, %v356
    %v465 = vpack.c.b16 %v359, %v358
    %v466 = vpack.c.b16 %v361, %v360
    %v467 = vpack.c.b16 %v363, %v362
    %v468 = vpack.c.b16 %v365, %v364
    %v469 = vpack.c.b16 %v367, %v366
    %v470 = vpack.c.b16 %v369, %v368
    %v471 = vpack.c.b16 %v371, %v370
    %v472 = vpack.c.b16 %v373, %v372
    %v473 = vpack.c.b16 %v375, %v374
    %v474 = vpack.c.b16 %v377, %v376
    %v475 = vpack.c.b16 %v379, %v378
    %v476 = vpack.c.b16 %v381, %v380
    %v477 = vpack.c.b16 %v383, %v382
    %v478 = vpack.c.b16 %v385, %v384
    %v479 = vpack.c.b16 %v387, %v386
    %v480 = vpack.c.b16 %v389, %v388
    %v481 = vpack.c.b16 %v391, %v390
    %v482 = vpack.c.b16 %v393, %v392
    %v483 = vpack.c.b16 %v395, %v394
    %v484 = vpack.c.b16 %v397, %v396
    %v485 = vpack.c.b16 %v399, %v398
    %v486 = vpack.c.b16 %v401, %v400
    %v487 = vpack.c.b16 %v403, %v402
    %v488 = vpack.c.b16 %v405, %v404
    %v489 = vpack.c.b16 %v407, %v406
    %v490 = vpack.c.b16 %v409, %v408
    %v491 = vpack.c.b16 %v411, %v410
    %v492 = vpack.c.b16 %v413, %v412
    %v493 = vpack.c.b16 %v415, %v414
    %v494 = vpack.c.b16 %v417, %v416
    %v495 = vpack.c.b16 %v419, %v418
    %v496 = vpack.c.b16 %v421, %v420
    %v497 = vpack.c.b16 %v423, %v422
    %v498 = vpack.c.b16 %v425, %v424
    %v499 = vpack.c.b16 %v427, %v426
    %v500 = vpack.c.b16 %v429, %v428
    %v501 = vpack.c.b16 %v431, %v430
    %v502 = vpack.c.b16 %v433, %v432
    %v503 = vpack.c.b16 %v435, %v434
    %v504 = vpack.c.b16 %v437, %v436
    %v505 = vpack.c.b16 %v439, %v438
    %v506 = vpack.c.b16 %v441, %v440
    %v507 = vpack.c.b16 %v443, %v442
    %572 = vmatprep.subr.bf16.mxu0 0
    %573 = vmatpush1.bf16.msra.mxu0 %v444
    %574 = vmatprep.subr.bf16.mxu0 0
    %575 = vmatpush1.bf16.msra.mxu0 %v445
    %576 = vmatprep.subr.bf16.mxu0 0
    %577 = vmatpush1.bf16.msra.mxu0 %v446
    %578 = vmatprep.subr.bf16.mxu0 0
    %579 = vmatpush1.bf16.msra.mxu0 %v447
    %580 = vmatprep.subr.bf16.mxu0 0
    %581 = vmatpush1.bf16.msra.mxu0 %v448
    %582 = vmatprep.subr.bf16.mxu0 0
    %583 = vmatpush1.bf16.msra.mxu0 %v449
    %584 = vmatprep.subr.bf16.mxu0 0
    %585 = vmatpush1.bf16.msra.mxu0 %v450
    %586 = vmatprep.subr.bf16.mxu0 0
    %587 = vmatpush1.bf16.msra.mxu0 %v451
    %588 = vmatprep.subr.bf16.mxu0 0
    %589 = vmatpush1.bf16.msra.mxu0 %v452
    %590 = vmatprep.subr.bf16.mxu0 0
    %591 = vmatpush1.bf16.msra.mxu0 %v453
    %592 = vmatprep.subr.bf16.mxu0 0
    %593 = vmatpush1.bf16.msra.mxu0 %v454
    %594 = vmatprep.subr.bf16.mxu0 0
    %595 = vmatpush1.bf16.msra.mxu0 %v455
    %596 = vmatprep.subr.bf16.mxu0 0
    %597 = vmatpush1.bf16.msra.mxu0 %v456
    %598 = vmatprep.subr.bf16.mxu0 0
    %599 = vmatpush1.bf16.msra.mxu0 %v457
    %600 = vmatprep.subr.bf16.mxu0 0
    %601 = vmatpush1.bf16.msra.mxu0 %v458
    %602 = vmatprep.subr.bf16.mxu0 0
    %603 = vmatpush1.bf16.msra.mxu0 %v459
    %604 = vmatprep.mubr.bf16.mxu0 %v53
    %605 = vmatmul.mubr.bf16.gmra.mrb[0].mxu0 %v52
    %v606 = vpop.f32.mrb[0].mxu0
    %v607 = vadd.f32 0.0, %v606
    %v608 = vpop.f32.mrb[0].mxu0
    %v609 = vpop.f32.mrb[0].mxu0
    %v610 = vadd.f32 0.0, %v609
    %v611 = vpop.f32.mrb[0].mxu0
    %612 = vdwg.mxu0
    %613 = vmatprep.subr.bf16.mxu0 0
    %614 = vmatpush1.bf16.msra.mxu0 %v460
    %615 = vmatprep.subr.bf16.mxu0 0
    %616 = vmatpush1.bf16.msra.mxu0 %v461
    %617 = vmatprep.subr.bf16.mxu0 0
    %618 = vmatpush1.bf16.msra.mxu0 %v462
    %619 = vmatprep.subr.bf16.mxu0 0
    %620 = vmatpush1.bf16.msra.mxu0 %v463
    %621 = vmatprep.subr.bf16.mxu0 0
    %622 = vmatpush1.bf16.msra.mxu0 %v464
    %623 = vmatprep.subr.bf16.mxu0 0
    %624 = vmatpush1.bf16.msra.mxu0 %v465
    %625 = vmatprep.subr.bf16.mxu0 0
    %626 = vmatpush1.bf16.msra.mxu0 %v466
    %627 = vmatprep.subr.bf16.mxu0 0
    %628 = vmatpush1.bf16.msra.mxu0 %v467
    %629 = vmatprep.subr.bf16.mxu0 0
    %630 = vmatpush1.bf16.msra.mxu0 %v468
    %631 = vmatprep.subr.bf16.mxu0 0
    %632 = vmatpush1.bf16.msra.mxu0 %v469
    %633 = vmatprep.subr.bf16.mxu0 0
    %634 = vmatpush1.bf16.msra.mxu0 %v470
    %635 = vmatprep.subr.bf16.mxu0 0
    %636 = vmatpush1.bf16.msra.mxu0 %v471
    %637 = vmatprep.subr.bf16.mxu0 0
    %638 = vmatpush1.bf16.msra.mxu0 %v472
    %639 = vmatprep.subr.bf16.mxu0 0
    %640 = vmatpush1.bf16.msra.mxu0 %v473
    %641 = vmatprep.subr.bf16.mxu0 0
    %642 = vmatpush1.bf16.msra.mxu0 %v474
    %643 = vmatprep.subr.bf16.mxu0 0
    %644 = vmatpush1.bf16.msra.mxu0 %v475
    %645 = vmatprep.mubr.bf16.mxu0 %v55
    %646 = vmatmul.mubr.bf16.gmra.mrb[0].mxu0 %v54
    %v647 = vpop.f32.mrb[0].mxu0
    %v648 = vadd.f32 %v607, %v647
    %v649 = vpop.f32.mrb[0].mxu0
    %v650 = vpop.f32.mrb[0].mxu0
    %v651 = vadd.f32 %v610, %v650
    %v652 = vpop.f32.mrb[0].mxu0
    %653 = vdwg.mxu0
    %654 = vmatprep.subr.bf16.mxu0 0
    %655 = vmatpush1.bf16.msra.mxu0 %v476
    %656 = vmatprep.subr.bf16.mxu0 0
    %657 = vmatpush1.bf16.msra.mxu0 %v477
    %658 = vmatprep.subr.bf16.mxu0 0
    %659 = vmatpush1.bf16.msra.mxu0 %v478
    %660 = vmatprep.subr.bf16.mxu0 0
    %661 = vmatpush1.bf16.msra.mxu0 %v479
    %662 = vmatprep.subr.bf16.mxu0 0
    %663 = vmatpush1.bf16.msra.mxu0 %v480
    %664 = vmatprep.subr.bf16.mxu0 0
    %665 = vmatpush1.bf16.msra.mxu0 %v481
    %666 = vmatprep.subr.bf16.mxu0 0
    %667 = vmatpush1.bf16.msra.mxu0 %v482
    %668 = vmatprep.subr.bf16.mxu0 0
    %669 = vmatpush1.bf16.msra.mxu0 %v483
    %670 = vmatprep.subr.bf16.mxu0 0
    %671 = vmatpush1.bf16.msra.mxu0 %v484
    %672 = vmatprep.subr.bf16.mxu0 0
    %673 = vmatpush1.bf16.msra.mxu0 %v485
    %674 = vmatprep.subr.bf16.mxu0 0
    %675 = vmatpush1.bf16.msra.mxu0 %v486
    %676 = vmatprep.subr.bf16.mxu0 0
    %677 = vmatpush1.bf16.msra.mxu0 %v487
    %678 = vmatprep.subr.bf16.mxu0 0
    %679 = vmatpush1.bf16.msra.mxu0 %v488
    %680 = vmatprep.subr.bf16.mxu0 0
    %681 = vmatpush1.bf16.msra.mxu0 %v489
    %682 = vmatprep.subr.bf16.mxu0 0
    %683 = vmatpush1.bf16.msra.mxu0 %v490
    %684 = vmatprep.subr.bf16.mxu0 0
    %685 = vmatpush1.bf16.msra.mxu0 %v491
    %686 = vmatprep.mubr.bf16.mxu0 %v57
    %687 = vmatmul.mubr.bf16.gmra.mrb[0].mxu0 %v56
    %v688 = vpop.f32.mrb[0].mxu0
    %v689 = vadd.f32 %v648, %v688
    %v690 = vpop.f32.mrb[0].mxu0
    %v691 = vpop.f32.mrb[0].mxu0
    %v692 = vadd.f32 %v651, %v691
    %v693 = vpop.f32.mrb[0].mxu0
    %694 = vdwg.mxu0
    %695 = vmatprep.subr.bf16.mxu0 0
    %696 = vmatpush1.bf16.msra.mxu0 %v492
    %697 = vmatprep.subr.bf16.mxu0 0
    %698 = vmatpush1.bf16.msra.mxu0 %v493
    %699 = vmatprep.subr.bf16.mxu0 0
    %700 = vmatpush1.bf16.msra.mxu0 %v494
    %701 = vmatprep.subr.bf16.mxu0 0
    %702 = vmatpush1.bf16.msra.mxu0 %v495
    %703 = vmatprep.subr.bf16.mxu0 0
    %704 = vmatpush1.bf16.msra.mxu0 %v496
    %705 = vmatprep.subr.bf16.mxu0 0
    %706 = vmatpush1.bf16.msra.mxu0 %v497
    %707 = vmatprep.subr.bf16.mxu0 0
    %708 = vmatpush1.bf16.msra.mxu0 %v498
    %709 = vmatprep.subr.bf16.mxu0 0
    %710 = vmatpush1.bf16.msra.mxu0 %v499
    %711 = vmatprep.subr.bf16.mxu0 0
    %712 = vmatpush1.bf16.msra.mxu0 %v500
    %713 = vmatprep.subr.bf16.mxu0 0
    %714 = vmatpush1.bf16.msra.mxu0 %v501
    %715 = vmatprep.subr.bf16.mxu0 0
    %716 = vmatpush1.bf16.msra.mxu0 %v502
    %717 = vmatprep.subr.bf16.mxu0 0
    %718 = vmatpush1.bf16.msra.mxu0 %v503
    %719 = vmatprep.subr.bf16.mxu0 0
    %720 = vmatpush1.bf16.msra.mxu0 %v504
    %721 = vmatprep.subr.bf16.mxu0 0
    %722 = vmatpush1.bf16.msra.mxu0 %v505
    %723 = vmatprep.subr.bf16.mxu0 0
    %724 = vmatpush1.bf16.msra.mxu0 %v506
    %725 = vmatprep.subr.bf16.mxu0 0
    %726 = vmatpush1.bf16.msra.mxu0 %v507
    %727 = vmatprep.mubr.bf16.mxu0 %v59
    %728 = vmatmul.mubr.bf16.gmra.mrb[0].mxu0 %v58
    %v729 = vpop.f32.mrb[0].mxu0
    %v730 = vadd.f32 %v689, %v729
    %v731 = vpop.f32.mrb[0].mxu0
    %v732 = vpop.f32.mrb[0].mxu0
    %v733 = vadd.f32 %v692, %v732
    %v734 = vpop.f32.mrb[0].mxu0
    %735 = vdwg.mxu0
    %v736 = vadd.f32 %v34, %v730
    %v737 = vadd.f32 %v35, %v733
    %738 = vst [vmem:[#allocation2] sm:$0xff] %v736
    %739 = vst [vmem:[#allocation2 + $0x8] sm:$0xff] %v737
    // Predicated region
    $region30: #{net_forward.1} parent=1 // pred_check
      %p740 = pneg %p28
    $region31: #{net_forward.1} parent=1 // pred_check_branch
      %742 = sbr.rel (%p740) target = $region33
    $region32: #{net_forward.1} parent=1 // pred_region
      %v743 = vld [vmem:[#allocation2] sm:$0xff]
      %v744 = vld [vmem:[#allocation2 + $0x8] sm:$0xff]
      %v745 = vld [vmem:[%s2] sm:$0x1]
      %v747 = vlaneseq
      %v748 = vshrl.u32 %v747, 7
      %v749 = vsub.s32 0, %v748
      %v750 = vrot.slane %v745, %v749
      %v752 = vadd.f32 %v743, %v750
      %v753 = vadd.f32 %v744, %v750
      %754 = vst [vmem:[#allocation2] sm:$0xff] %v752
      %755 = vst [vmem:[#allocation2 + $0x8] sm:$0xff] %v753
      %v756 = vld [vmem:[#allocation2] sm:$0xff]
      %v757 = vld [vmem:[#allocation2 + $0x8] sm:$0xff]
      %v758 = vtanh.pop %v756
      %v759 = vtanh.pop %v757
      %v760 = vld [vmem:[%s3] sm:$0x1]
      %v762 = vlaneseq
      %v763 = vshrl.u32 %v762, 7
      %v764 = vsub.s32 0, %v763
      %v765 = vrot.slane %v760, %v764
      %v767 = vmul.f32 %v758, %v765
      %v768 = vmul.f32 %v759, %v765
      %769 = vadd.xlane.f32.xlu0 %v767
      %v770 = vpop.xlane.xlu0 %769
      %771 = vadd.xlane.f32.xlu0 %v768
      %v772 = vpop.xlane.xlu0 %771
      %v775 = vlaneseq
      %v776 = vand.u32 %v775, 127
      %v777 = vlaneseq
      %v778 = vshrl.u32 %v777, 7
      %v779 = vsub.s32 %v776, %v778
      %v780 = vrot.slane %v770, %v779
      %v781 = vlaneseq
      %v782 = vshrl.u32 %v781, 7
      %v783 = vsub.s32 %v776, %v782
      %v784 = vrot.slane %v772, %v783
      %vm785 = vcmask 1041409
      %v786 = vsel %vm785, %v784, %v780
      %vm788 = vcmask 58368
      %v789 = vsel %vm788, %v786, -inf
      %790 = vmax.xlane.f32.xlu0 %v789
      %v791 = vpop.xlane.xlu0 %790
      %v793 = vlaneseq
      %v794 = vshrl.u32 %v793, 7
      %v795 = vsub.s32 0, %v794
      %v796 = vrot.slane %v791, %v795
      %v797 = vlaneseq
      %v798 = vshrl.u32 %v797, 7
      %v799 = vsub.s32 1, %v798
      %v800 = vrot.slane %v791, %v799
      %v803 = vsub.f32 %v770, %v796
      %v804 = vsub.f32 %v772, %v800
      %v805 = vmul.f32 %v803, 1.442695
      %v806 = vpow.pop %v805
      %v807 = vmul.f32 %v804, 1.442695
      %v808 = vpow.pop %v807
      %811 = vset.pattern.permute.xlu0 0
      %812 = vperm.xlu0 %811, %v806
      %v813 = vpop.permute.xlu0 %812
      %814 = vset.pattern.permute.xlu0 0
      %815 = vperm.xlu0 %814, %v808
      %v816 = vpop.permute.xlu0 %815
      %v817 = vlaneseq
      %v818 = vshrl.u32 %v817, 7
      %v819 = vsub.s32 %v776, %v818
      %v820 = vrot.slane %v813, %v819
      %v821 = vlaneseq
      %v822 = vshrl.u32 %v821, 7
      %v823 = vsub.s32 %v776, %v822
      %v824 = vrot.slane %v816, %v823
      %v825 = vsel %vm785, %v824, %v820
      %v827 = vsel %vm788, %v825, 0.0
      %828 = vadd.xlane.f32.xlu0 %v827
      %v829 = vpop.xlane.xlu0 %828
      %v830 = vrcp.pop %v829
      %v832 = vlaneseq
      %v833 = vshrl.u32 %v832, 7
      %v834 = vsub.s32 0, %v833
      %v835 = vrot.slane %v830, %v834
      %v836 = vlaneseq
      %v837 = vshrl.u32 %v836, 7
      %v838 = vsub.s32 1, %v837
      %v839 = vrot.slane %v830, %v838
      %v842 = vmul.f32 %v806, %v835
      %v843 = vmul.f32 %v808, %v839
      %845 = vset.pattern.permute.xlu0 0
      %846 = vperm.xlu0 %845, %v842
      %v847 = vpop.permute.xlu0 %846
      %850 = vset.pattern.permute.xlu0 0
      %851 = vperm.xlu0 %850, %v843
      %v852 = vpop.permute.xlu0 %851
      %v854 = vmul.f32 %v756, %v847
      %v855 = vmul.f32 %v757, %v852
      %v856 = vrot.slane %v854, 4
      %v857 = vadd.f32 %v854, %v856
      %v858 = vrot.slane %v857, 2
      %v859 = vadd.f32 %v857, %v858
      %v860 = vrot.slane %v859, 1
      %v861 = vadd.f32 %v859, %v860
      %v862 = vrot.slane %v855, 4
      %v863 = vadd.f32 %v855, %v862
      %v864 = vrot.slane %v863, 2
      %v865 = vadd.f32 %v863, %v864
      %v866 = vrot.slane %v865, 1
      %v867 = vadd.f32 %v865, %v866
      %v868 = vld [vmem:[%s4] sm:$0xff]
      %v869 = vld [vmem:[%s4 + $0x8] sm:$0xff]
      %v870 = vld [vmem:[%s4 + $0x10] sm:$0xff]
      %v871 = vld [vmem:[%s4 + $0x18] sm:$0xff]
      %v872 = vld [vmem:[%s4 + $0x20] sm:$0xff]
      %v873 = vld [vmem:[%s4 + $0x28] sm:$0xff]
      %v874 = vld [vmem:[%s4 + $0x30] sm:$0xff]
      %v875 = vld [vmem:[%s4 + $0x38] sm:$0xff]
      %v876 = vld [vmem:[%s4 + $0x40] sm:$0xff]
      %v877 = vld [vmem:[%s4 + $0x48] sm:$0xff]
      %v878 = vld [vmem:[%s4 + $0x50] sm:$0xff]
      %v879 = vld [vmem:[%s4 + $0x58] sm:$0xff]
      %v880 = vld [vmem:[%s4 + $0x60] sm:$0xff]
      %v881 = vld [vmem:[%s4 + $0x68] sm:$0xff]
      %v882 = vld [vmem:[%s4 + $0x70] sm:$0xff]
      %v883 = vld [vmem:[%s4 + $0x78] sm:$0xff]
      %v884 = vld [vmem:[%s5] sm:$0x1]
      %v886 = vlaneseq
      %v887 = vshrl.u32 %v886, 7
      %v888 = vsub.s32 0, %v887
      %v889 = vrot.slane %v884, %v888
      %v893 = vsel %vm785, %v867, %v861
      %895 = vmatprep.subr.mxu0 0.0
      %896 = vmatpush1.msra.mxu0 %v868
      %897 = vmatprep.subr.mxu0 0.0
      %898 = vmatpush1.msra.mxu0 %v869
      %899 = vmatprep.subr.mxu0 0.0
      %900 = vmatpush1.msra.mxu0 %v870
      %901 = vmatprep.subr.mxu0 0.0
      %902 = vmatpush1.msra.mxu0 %v871
      %903 = vmatprep.subr.mxu0 0.0
      %904 = vmatpush1.msra.mxu0 %v872
      %905 = vmatprep.subr.mxu0 0.0
      %906 = vmatpush1.msra.mxu0 %v873
      %907 = vmatprep.subr.mxu0 0.0
      %908 = vmatpush1.msra.mxu0 %v874
      %909 = vmatprep.subr.mxu0 0.0
      %910 = vmatpush1.msra.mxu0 %v875
      %911 = vmatprep.subr.mxu0 0.0
      %912 = vmatpush1.msra.mxu0 %v876
      %913 = vmatprep.subr.mxu0 0.0
      %914 = vmatpush1.msra.mxu0 %v877
      %915 = vmatprep.subr.mxu0 0.0
      %916 = vmatpush1.msra.mxu0 %v878
      %917 = vmatprep.subr.mxu0 0.0
      %918 = vmatpush1.msra.mxu0 %v879
      %919 = vmatprep.subr.mxu0 0.0
      %920 = vmatpush1.msra.mxu0 %v880
      %921 = vmatprep.subr.mxu0 0.0
      %922 = vmatpush1.msra.mxu0 %v881
      %923 = vmatprep.subr.mxu0 0.0
      %924 = vmatpush1.msra.mxu0 %v882
      %925 = vmatprep.subr.mxu0 0.0
      %926 = vmatpush1.msra.mxu0 %v883
      %927 = vmatprep.subr.mxu0 0.0
      %928 = vmatpush1.msra.mxu0 0.0
      %929 = vmatprep.subr.mxu0 0.0
      %930 = vmatpush1.msra.mxu0 0.0
      %931 = vmatprep.subr.mxu0 0.0
      %932 = vmatpush1.msra.mxu0 0.0
      %933 = vmatprep.subr.mxu0 0.0
      %934 = vmatpush1.msra.mxu0 0.0
      %935 = vmatprep.subr.mxu0 0.0
      %936 = vmatpush1.msra.mxu0 0.0
      %937 = vmatprep.subr.mxu0 0.0
      %938 = vmatpush1.msra.mxu0 0.0
      %939 = vmatprep.subr.mxu0 0.0
      %940 = vmatpush1.msra.mxu0 0.0
      %941 = vmatprep.subr.mxu0 0.0
      %942 = vmatpush1.msra.mxu0 0.0
      %943 = vmatprep.subr.mxu0 0.0
      %944 = vmatpush1.msra.mxu0 0.0
      %945 = vmatprep.subr.mxu0 0.0
      %946 = vmatpush1.msra.mxu0 0.0
      %947 = vmatprep.subr.mxu0 0.0
      %948 = vmatpush1.msra.mxu0 0.0
      %949 = vmatprep.subr.mxu0 0.0
      %950 = vmatpush1.msra.mxu0 0.0
      %951 = vmatprep.subr.mxu0 0.0
      %952 = vmatpush1.msra.mxu0 0.0
      %953 = vmatprep.subr.mxu0 0.0
      %954 = vmatpush1.msra.mxu0 0.0
      %955 = vmatprep.subr.mxu0 0.0
      %956 = vmatpush1.msra.mxu0 0.0
      %957 = vmatprep.subr.mxu0 0.0
      %958 = vmatpush1.msra.mxu0 0.0
      %959 = vmatprep.mubr.f32.mxu0 0.0
      %960 = vmatmul.mubr.f32.gmra.mrb[0].mxu0 %v893
      %v961 = vpop.f32.mrb[0].mxu0
      %v962 = vadd.f32 %v889, %v961
      %v963 = vpop.f32.mrb[0].mxu0
      %964 = vdwg.mxu0
      %v965 = vxor.u32 %v962, 2147483648
      %v966 = vmul.f32 %v965, 1.442695
      %v967 = vpow.pop %v966
      %v968 = vadd.f32 %v967, 1.0
      %v969 = vrcp.pop %v968
      %v970 = vmul.f32 1.0, %v969
      %971 = vst [vmem:[#allocation3] sm:$0x3] %v970
      %v972 = vlaneseq
      %v973 = vshrl.u32 %v972, 7
      %v974 = vsub.s32 %v776, %v973
      %v975 = vrot.slane %v847, %v974
      %v976 = vlaneseq
      %v977 = vshrl.u32 %v976, 7
      %v978 = vsub.s32 %v776, %v977
      %v979 = vrot.slane %v852, %v978
      %v980 = vsel %vm785, %v979, %v975
      %vm982 = vcmask 64512
      %v983 = vsel %vm982, %v980, 0.0
      %984 = vst [vmem:[#allocation5] sm:$0x3] %v983
    $region33: #{net_forward.1} parent=1 // pred_fallthru
      _
    // Predicated region
    $region34: #{net_forward.1} parent=1 // pred_check
      _
    $region35: #{net_forward.1} parent=1 // pred_check_branch
      %986 = sbr.rel (0) target = $region37
    $region36: #{net_forward.1} parent=1 // pred_region
      %s988 = ssub.s32 32, 32
      %989 = vsyncadd [#allocation4], %s988
      %s991 = sshll.u32 [#allocation3], 4
      %s992 = int_to_ptr.vmem [resolvable:$true] %s991
      %994 = dma.vmem_to_hbm [thread:$0]  %s992, 32, %s6, [#allocation4]
    $region37: #{net_forward.1} parent=1 // pred_fallthru
      _
    // Predicated region
    $region38: #{net_forward.1} parent=1 // pred_check
      _
    $region39: #{net_forward.1} parent=1 // pred_check_branch
      %996 = sbr.rel (0) target = $region41
    $region40: #{net_forward.1} parent=1 // pred_region
      %s998 = ssub.s32 32, 32
      %999 = vsyncadd [#allocation6], %s998
      %s1001 = sshll.u32 [#allocation5], 4
      %s1002 = int_to_ptr.vmem [resolvable:$true] %s1001
      %1004 = dma.vmem_to_hbm [thread:$0]  %s1002, 32, %s7, [#allocation6]
    $region41: #{net_forward.1} parent=1 // pred_fallthru
      _
    // Predicated region
    $region42: #{net_forward.1} parent=1 // pred_check
      _
    $region43: #{net_forward.1} parent=1 // pred_check_branch
      %1006 = sbr.rel (0) target = $region45
    $region44: #{net_forward.1} parent=1 // pred_region
      %1007 = dma.done [#allocation4], 32
    $region45: #{net_forward.1} parent=1 // pred_fallthru
      _
    // Predicated region
    $region46: #{net_forward.1} parent=1 // pred_check
      _
    $region47: #{net_forward.1} parent=1 // pred_check_branch
      %1009 = sbr.rel (0) target = $region49
    $region48: #{net_forward.1} parent=1 // pred_region
      %1010 = dma.done [#allocation6], 32
    $region49: #{net_forward.1} parent=1 // pred_fallthru
      _
    %1011 = vsyncpa [#allocation4], 1
    %1012 = vsyncpa [#allocation6], 1

</llo_original>
